<compile_context>
chip_gen: v7x
topology: tpu7x:2x2x1
jax: 0.10.0
libtpu: 0.0.40
codegen_flags: <defaults>
</compile_context>

<pallas_src>
import functools

import jax
import jax.numpy as jnp
from jax import lax
from jax.experimental import pallas as pl
from jax.experimental.pallas import tpu as pltpu

_LANE = 128
_FAST_PATH_MAX_ROWS = 2048     # <= 1 MiB f32 resident in VMEM -> fused kernel


def _default_row_tile() -> int:
    """Generation-aware row tile (rows of 128 lanes) for the streaming path."""
    try:
        kind = jax.devices()[0].device_kind.lower()
    except Exception:
        kind = ""
    if "v7" in kind or "tpu7" in kind:
        return 4096   # 2 MiB f32 tiles: ~3.2 TB/s HBM needs bigger tiles.
    return 2048       # 1 MiB f32 tiles for v5e / v6e (multiple of 16: bf16-safe).


# --------------------- fast path: x resident in VMEM ------------------------


def _fused_kernel(x_ref, wb_ref, o_ref, *, inv_n: float, eps: float, n_pad: int):
    x = x_ref[...].astype(jnp.float32)
    mean = jnp.sum(x) * inv_n          # zero padding contributes 0 to the sum
    xc = x - mean
    if n_pad > 0:
        # Mask the <=127 zero-pad elements out of the centered second pass.
        r = lax.broadcasted_iota(jnp.int32, x.shape, 0)
        c = lax.broadcasted_iota(jnp.int32, x.shape, 1)
        n_valid = x.shape[0] * x.shape[1] - n_pad
        xs = jnp.where(r * _LANE + c < n_valid, xc, 0.0)
    else:
        xs = xc
    var = jnp.sum(xs * xs) * inv_n      # exact two-pass variance (no cancellation)
    std = jnp.sqrt(var)
    scale = wb_ref[0] / (std + eps)     # fold affine weight into the scale
    shift = wb_ref[1]
    o_ref[...] = (xc * scale + shift).astype(o_ref.dtype)


# --------------------- streaming path: two parallel calls -------------------


def _stats_kernel(x_ref, sum_ref, sq_ref, *, rows: int, row_tile: int,
                  needs_mask: bool):
    i = pl.program_id(0)
    x = x_ref[...].astype(jnp.float32)
    if needs_mask:
        # Last tile is partial: rows >= `rows` hold unspecified Pallas padding.
        r = lax.broadcasted_iota(jnp.int32, x.shape, 0) + i * row_tile
        x = jnp.where(r < rows, x, 0.0)
    # Accumulate into an (8,128) partial per tile: pure vreg adds, the
    # cross-sublane/lane reduce is deferred to a tiny XLA reduction.
    xr = x.reshape(row_tile // 8, 8, _LANE)
    sum_ref[0] = jnp.sum(xr, axis=0)
    sq_ref[0] = jnp.sum(xr * xr, axis=0)


def _normalize_kernel(x_ref, ss_ref, o_ref):
    scale = ss_ref[0]
    shift = ss_ref[1]
    # 2 VALU ops per element, full-lane (unmasked) stores.
    o_ref[...] = (x_ref[...].astype(jnp.float32) * scale + shift).astype(o_ref.dtype)


# --------------------------------- wrapper ----------------------------------


def layer_norm(x: jax.Array, weight: jax.Array, bias: jax.Array,
               eps: float = 1e-5, *, row_tile: int | None = None,
               max_fast_rows: int = _FAST_PATH_MAX_ROWS) -> jax.Array:
    """x: (N, C) float array. weight/bias: shape (1,) affine parameters."""
    N, C = x.shape
    n_elems = N * C
    inv_n = 1.0 / float(n_elems)

    rows = -(-n_elems // _LANE)
    n_pad = rows * _LANE - n_elems

    x_flat = x.reshape(-1)
    if n_pad:
        # TODO(synk): for non-128-aligned N*C this pad (and the final slice)
        # each cost one extra HBM pass; a manual-DMA kernel over the raw (N, C)
        # array would remove them.
        x_flat = jnp.pad(x_flat, (0, n_pad))
    x2 = x_flat.reshape(rows, _LANE)

    w = weight.reshape(-1)[0].astype(jnp.float32)
    b = bias.reshape(-1)[0].astype(jnp.float32)

    if rows <= max_fast_rows:
        # -------- fused single-read path: 1 HBM read + 1 HBM write ----------
        wb = jnp.stack([w, b])
        kernel = functools.partial(_fused_kernel, inv_n=inv_n, eps=float(eps),
                                   n_pad=n_pad)
        out2 = pl.pallas_call(
            kernel,
            out_shape=jax.ShapeDtypeStruct((rows, _LANE), x.dtype),
            in_specs=[pl.BlockSpec(memory_space=pltpu.MemorySpace.VMEM),
                      pl.BlockSpec(memory_space=pltpu.MemorySpace.SMEM)],
            out_specs=pl.BlockSpec(memory_space=pltpu.MemorySpace.VMEM),
        )(x2, wb)
    else:
        # -------- streaming path: parallel stats + parallel normalize -------
        if row_tile is None:
            row_tile = _default_row_tile()
        assert row_tile > 0 and row_tile % 8 == 0, "row_tile must be a multiple of 8"

        n_tiles = -(-rows // row_tile)
        needs_mask = (rows % row_tile) != 0

        stats = functools.partial(_stats_kernel, rows=rows, row_tile=row_tile,
                                  needs_mask=needs_mask)
        psum, psq = pl.pallas_call(
            stats,
            out_shape=(jax.ShapeDtypeStruct((n_tiles, 8, _LANE), jnp.float32),
                       jax.ShapeDtypeStruct((n_tiles, 8, _LANE), jnp.float32)),
            grid_spec=pltpu.PrefetchScalarGridSpec(
                num_scalar_prefetch=0,
                grid=(n_tiles,),
                in_specs=[pl.BlockSpec((row_tile, _LANE), lambda i: (i, 0))],
                out_specs=[pl.BlockSpec((1, 8, _LANE), lambda i: (i, 0, 0)),
                           pl.BlockSpec((1, 8, _LANE), lambda i: (i, 0, 0))],
            ),
            compiler_params=pltpu.CompilerParams(
                dimension_semantics=("parallel",)),
        )(x2)

        # Tiny one-shot finalization in XLA (hoisted out of the per-tile loop).
        total = jnp.sum(psum)
        total_sq = jnp.sum(psq)
        mean = total * inv_n
        # NOTE: E[x^2] - mean^2 in f32; can lose precision when |mean| >> std.
        var = jnp.maximum(total_sq * inv_n - mean * mean, 0.0)
        inv_std = 1.0 / (jnp.sqrt(var) + eps)
        scale = w * inv_std
        shift = b - mean * scale           # o = x*scale + shift  (2 ops/elem)
        ss = jnp.stack([scale, shift])

        out2 = pl.pallas_call(
            _normalize_kernel,
            out_shape=jax.ShapeDtypeStruct((rows, _LANE), x.dtype),
            grid_spec=pltpu.PrefetchScalarGridSpec(
                num_scalar_prefetch=0,
                grid=(n_tiles,),
                in_specs=[pl.BlockSpec((row_tile, _LANE), lambda i: (i, 0)),
                          pl.BlockSpec(memory_space=pltpu.MemorySpace.SMEM)],
                out_specs=pl.BlockSpec((row_tile, _LANE), lambda i: (i, 0)),
            ),
            compiler_params=pltpu.CompilerParams(
                dimension_semantics=("parallel",)),
        )(x2, ss)

    out_flat = out2.reshape(-1)
    if n_pad:
        out_flat = out_flat[:n_elems]
    return out_flat.reshape(N, C)


def layer_norm_ref(x, weight, bias, eps=1e-5):
    """Pure-JAX reference mirroring the PyTorch forward (batch=None)."""
    xf = x.astype(jnp.float32)
    xc = xf - jnp.mean(xf)
    std = jnp.sqrt(jnp.mean(xc * xc))
    out = xc / (std + eps)
    out = out * weight.astype(jnp.float32)[0] + bias.astype(jnp.float32)[0]
    return out.astype(x.dtype)


if __name__ == "__main__":
    key = jax.random.PRNGKey(0)
    k1, k2, k3 = jax.random.split(key, 3)

    # Affine params are (1,)-shaped; use non-trivial values to exercise folding.
    weight = jnp.array([1.5], dtype=jnp.float32)
    bias = jnp.array([0.25], dtype=jnp.float32)

    def check(out, ref, x, tag):
        assert out.shape == x.shape and out.dtype == x.dtype, tag
        assert jnp.allclose(out, ref, atol=1e-4, rtol=1e-4), f"mismatch ({tag})"

    # Case 1: aligned (N*C % 128 == 0) -> fast path, no pad / no slice.
    x1 = jax.random.normal(k1, (64, 32), dtype=jnp.float32)
    out1 = jax.block_until_ready(layer_norm(x1, weight, bias, eps=1e-5))
    check(out1, layer_norm_ref(x1, weight, bias, eps=1e-5), x1, "fast aligned")

    # Case 2: ragged size -> fast path with in-kernel pad masking.
    x2 = jax.random.normal(k2, (50, 24), dtype=jnp.float32)
    out2 = jax.block_until_ready(layer_norm(x2, weight, bias, eps=1e-5))
    check(out2, layer_norm_ref(x2, weight, bias, eps=1e-5), x2, "fast ragged")

    # Case 3: force the streaming (two-call, parallel-tile) path.
    x3 = jax.random.normal(k3, (96, 128), dtype=jnp.float32)
    out3 = jax.block_until_ready(
        layer_norm(x3, weight, bias, eps=1e-5, row_tile=32, max_fast_rows=0))
    check(out3, layer_norm_ref(x3, weight, bias, eps=1e-5), x3, "stream aligned")

    # Case 4: streaming path with a partial last tile (in-kernel tail mask).
    out4 = jax.block_until_ready(
        layer_norm(x2, weight, bias, eps=1e-5, row_tile=8, max_fast_rows=0))
    check(out4, layer_norm_ref(x2, weight, bias, eps=1e-5), x2, "stream ragged")

    print("KERNEL_OK")
</pallas_src>

<mosaic_0001>
module attributes {stable_mosaic.version = 11 : i64} {
  func.func @_fused_kernel(%arg0: memref<16x128xf32, #tpu.memory_space<vmem>>, %arg1: memref<2xf32, #tpu.memory_space<smem>>, %arg2: memref<16x128xf32, #tpu.memory_space<vmem>>) attributes {dimension_semantics = [], scalar_prefetch = 0 : i64, scratch_operands = 0 : i64, tpu.core_type = #tpu.core_type<tc>} {
    %c0 = arith.constant 0 : index
    %c0_0 = arith.constant 0 : index
    %0 = vector.load %arg0[%c0, %c0_0] : memref<16x128xf32, #tpu.memory_space<vmem>>, vector<16x128xf32>
    %1 = vector.shape_cast %0 : vector<16x128xf32> to vector<1x16x128xf32>
    %cst = arith.constant dense<0.000000e+00> : vector<1xf32>
    %2 = vector.multi_reduction <add>, %1, %cst [1, 2] : vector<1x16x128xf32> to vector<1xf32>
    %3 = vector.shape_cast %2 : vector<1xf32> to vector<1x1x1xf32>
    %4 = vector.extract %3[0, 0, 0] : f32 from vector<1x1x1xf32>
    %cst_1 = arith.constant 4.8828125E-4 : f32
    %5 = arith.mulf %4, %cst_1 : f32
    %6 = vector.broadcast %5 : f32 to vector<16x128xf32>
    %7 = arith.subf %0, %6 : vector<16x128xf32>
    %8 = arith.mulf %7, %7 : vector<16x128xf32>
    %9 = vector.shape_cast %8 : vector<16x128xf32> to vector<1x16x128xf32>
    %cst_2 = arith.constant dense<0.000000e+00> : vector<1xf32>
    %10 = vector.multi_reduction <add>, %9, %cst_2 [1, 2] : vector<1x16x128xf32> to vector<1xf32>
    %11 = vector.shape_cast %10 : vector<1xf32> to vector<1x1x1xf32>
    %12 = vector.extract %11[0, 0, 0] : f32 from vector<1x1x1xf32>
    %cst_3 = arith.constant 4.8828125E-4 : f32
    %13 = arith.mulf %12, %cst_3 : f32
    %14 = math.sqrt %13 : f32
    %c0_4 = arith.constant 0 : index
    %15 = memref.load %arg1[%c0_4] : memref<2xf32, #tpu.memory_space<smem>>
    %cst_5 = arith.constant 9.99999974E-6 : f32
    %16 = arith.addf %14, %cst_5 : f32
    %17 = arith.divf %15, %16 : f32
    %c1 = arith.constant 1 : index
    %18 = memref.load %arg1[%c1] : memref<2xf32, #tpu.memory_space<smem>>
    %19 = vector.broadcast %17 : f32 to vector<16x128xf32>
    %20 = arith.mulf %7, %19 : vector<16x128xf32>
    %21 = vector.broadcast %18 : f32 to vector<16x128xf32>
    %22 = arith.addf %20, %21 : vector<16x128xf32>
    %c0_6 = arith.constant 0 : index
    %c0_7 = arith.constant 0 : index
    %23 = vector.load %arg2[%c0_6, %c0_7] : memref<16x128xf32, #tpu.memory_space<vmem>>, vector<16x128xf32>
    tpu.vector_store %arg2[%c0_6, %c0_7], %22 {strides = array<i32>} : memref<16x128xf32, #tpu.memory_space<vmem>>, vector<16x128xf32>,
    return
  }
}

</mosaic_0001>

<llo_original>
// kernel: tpu_custom_call.1
$region0: #{tpu_custom_call.1}
  #allocation0 [shape = 'u32[]', space=smem, size = 0x4, offset = 0x4, fixed_abs, tag = 'smem constant byte address 0x4 - core index']
  #allocation1 [shape = 'u32[144,128]{1,0:T(1,128)}', space=vmem, size = 0x12000, scoped, tag = 'internal scratch']
  %s0 = inlined_call_operand.hbm [shape: f32[16,128], index: 0, kind: input, shape index: {}]
  %s1 = inlined_call_operand.vmem [shape: f32[2], index: 1, kind: input, shape index: {}]
  %s2 = inlined_call_operand.hbm [shape: f32[16,128], index: 2, kind: output, shape index: {}]
  %s3 = sld [smem:[#allocation0]]
  $region26: #{tpu_custom_call.1} parent=0
    _
  %s5 = ssub.s32 1, %s3
  %s6 = scalar_select 0, %s5, %s3
  $region1: #{tpu_custom_call.1} parent=0
    #allocation2 [shape = 'u8[8192]{0}', space=vmem, size = 0x2000, scoped, tag = 'input window, operand 0, single buffered']
    #allocation3 [shape = 's32[1]{0}', space=sflag, size = 0x4, scoped, tag = 'scoped memory for tpu_custom_call.1']
    #allocation4 [shape = 's32[1]{0}', space=sflag, size = 0x4, scoped, tag = 'scoped memory for tpu_custom_call.1']
    #allocation5 [shape = 's32[1]{0}', space=sflag, size = 0x4, scoped, tag = 'scoped memory for tpu_custom_call.1']
    #allocation6 [shape = 'u8[512]{0}', space=smem, size = 0x200, scoped, tag = 'input window, operand 1, single buffered']
    #allocation7 [shape = 'u8[8192]{0}', space=vmem, size = 0x2000, scoped, tag = 'output window, operand 0, single buffered']
    %7 = vsyncpa [#allocation3], 0
    %8 = vsyncpa [#allocation5], 0
    %9 = vsyncpa [#allocation4], 0
    // Predicated region
    $region2: #{tpu_custom_call.1} parent=1 // pred_check
      _
    $region3: #{tpu_custom_call.1} parent=1 // pred_check_branch
      %11 = sbr.rel (0) target = $region5
    $region4: #{tpu_custom_call.1} parent=1 // pred_region
      %s13 = ssub.s32 256, 256
      %14 = vsyncadd [#allocation3], %s13
      %s15 = sshll.u32 [#allocation2], 4
      %s16 = int_to_ptr.vmem [resolvable:$true] %s15
      %21 = dma.hbm_to_vmem [thread:$0]  %s0, 256, %s16, [#allocation3], 128, 128, 8
    $region5: #{tpu_custom_call.1} parent=1 // pred_fallthru
      _
    // Predicated region
    $region6: #{tpu_custom_call.1} parent=1 // pred_check
      _
    $region7: #{tpu_custom_call.1} parent=1 // pred_check_branch
      %23 = sbr.rel (0) target = $region9
    $region8: #{tpu_custom_call.1} parent=1 // pred_region
      %s25 = ssub.s32 16, 16
      %26 = vsyncadd [#allocation5], %s25
      %s28 = sshll.u32 %s1, 4
      %s29 = int_to_ptr.vmem [resolvable:$true] %s28
      %31 = dma.vmem_to_smem %s29, 16, [#allocation6], [#allocation5]
    $region9: #{tpu_custom_call.1} parent=1 // pred_fallthru
      _
    // Predicated region
    $region10: #{tpu_custom_call.1} parent=1 // pred_check
      _
    $region11: #{tpu_custom_call.1} parent=1 // pred_check_branch
      %33 = sbr.rel (0) target = $region13
    $region12: #{tpu_custom_call.1} parent=1 // pred_region
      %34 = dma.done [#allocation3], 256
    $region13: #{tpu_custom_call.1} parent=1 // pred_fallthru
      _
    // Predicated region
    $region14: #{tpu_custom_call.1} parent=1 // pred_check
      _
    $region15: #{tpu_custom_call.1} parent=1 // pred_check_branch
      %36 = sbr.rel (0) target = $region17
    $region16: #{tpu_custom_call.1} parent=1 // pred_region
      %37 = dma.done [#allocation5], 16
    $region17: #{tpu_custom_call.1} parent=1 // pred_fallthru
      _
    %38 = sfence
    %v39 = vld [vmem:[#allocation2] sm:$0xff]
    %v40 = vld [vmem:[#allocation2 + $0x8] sm:$0xff]
    %v41 = vadd.f32 %v39, %v40
    %42 = vadd.xlane.f32.xlu0 %v41
    %v43 = vpop.xlane.xlu0 %42
    %v44 = vrot.slane %v43, 4
    %v45 = vadd.f32 %v43, %v44
    %v46 = vrot.slane %v45, 2
    %v47 = vadd.f32 %v45, %v46
    %v48 = vrot.slane %v47, 1
    %v49 = vadd.f32 %v47, %v48
    %s50 = vtos %v49
    %s51 = smul.f32 %s50, 0.00048828125
    %v52 = vstv %s51
    %v53 = vsub.f32 %v39, %v52
    %v54 = vsub.f32 %v40, %v52
    %v55 = vmul.f32 %v53, %v53
    %v56 = vmul.f32 %v54, %v54
    %v57 = vadd.f32 %v55, %v56
    %58 = vadd.xlane.f32.xlu0 %v57
    %v59 = vpop.xlane.xlu0 %58
    %v60 = vrot.slane %v59, 4
    %v61 = vadd.f32 %v59, %v60
    %v62 = vrot.slane %v61, 2
    %v63 = vadd.f32 %v61, %v62
    %v64 = vrot.slane %v63, 1
    %v65 = vadd.f32 %v63, %v64
    %s66 = vtos %v65
    %s67 = smul.f32 %s66, 0.00048828125
    %v68 = vstv %s67
    %v69 = vrsqrt.pop %v68
    %v70 = vmul.f32 %v68, %v69
    %vm71 = vcmp.eq.f32.partialorder %v68, inf
    %v72 = vsel %vm71, %v68, %v70
    %vm73 = vcmp.eq.f32.partialorder %v68, 0.0
    %v74 = vand.u32 %v68, 2147483648
    %v75 = vsel %vm73, %v74, %v72
    %s76 = vtos %v75
    %s77 = sld [smem:[#allocation6]]
    %s78 = sadd.f32 %s76, 1e-05
    %v79 = vstv %s78
    %v80 = vrcp.pop %v79
    %s81 = vtos %v80
    %s82 = smul.f32 %s77, %s81
    %s83 = sld [smem:[#allocation6 + $0x1]]
    %v84 = vstv %s82
    %v85 = vmul.f32 %v53, %v84
    %v86 = vmul.f32 %v54, %v84
    %v87 = vstv %s83
    %v88 = vadd.f32 %v85, %v87
    %v89 = vadd.f32 %v86, %v87
    %90 = vst [vmem:[#allocation7] sm:$0xff] %v88
    %91 = vst [vmem:[#allocation7 + $0x8] sm:$0xff] %v89
    // Predicated region
    $region18: #{tpu_custom_call.1} parent=1 // pred_check
      _
    $region19: #{tpu_custom_call.1} parent=1 // pred_check_branch
      %93 = sbr.rel (0) target = $region21
    $region20: #{tpu_custom_call.1} parent=1 // pred_region
      %s95 = ssub.s32 256, 256
      %96 = vsyncadd [#allocation4], %s95
      %s97 = sshll.u32 [#allocation7], 4
      %s98 = int_to_ptr.vmem [resolvable:$true] %s97
      %103 = dma.vmem_to_hbm [thread:$0]  %s98, 256, %s2, [#allocation4], 128, 128, 8
    $region21: #{tpu_custom_call.1} parent=1 // pred_fallthru
      _
    // Predicated region
    $region22: #{tpu_custom_call.1} parent=1 // pred_check
      _
    $region23: #{tpu_custom_call.1} parent=1 // pred_check_branch
      %105 = sbr.rel (0) target = $region25
    $region24: #{tpu_custom_call.1} parent=1 // pred_region
      %106 = dma.done [#allocation4], 256
    $region25: #{tpu_custom_call.1} parent=1 // pred_fallthru
      _
    %107 = vsyncpa [#allocation3], 1
    %108 = vsyncpa [#allocation4], 1
    %109 = vsyncpa [#allocation5], 1

</llo_original>
